<compile_context>
chip_gen: v5e
topology: v5e:2x2
jax: 0.10.0
libtpu: 0.0.40
codegen_flags: <defaults>
</compile_context>

<pallas_src>
import jax
import jax.numpy as jnp
from jax.experimental import pallas as pl
from jax.experimental.pallas import tpu as pltpu


def _classify_country_kernel(x_ref, w1_ref, b1_ref, w2_ref, b2_ref, o_ref):
    # Cast activations to bf16 on the VPU right before the MXU dot (f32 accumulate).
    x = x_ref[...].astype(jnp.bfloat16)
    h = jnp.dot(x, w1_ref[...], preferred_element_type=jnp.float32)
    h = h + b1_ref[...]                      # b1 is (1, H) -> broadcast over batch rows
    h = jnp.maximum(h, 0.0)                  # ReLU
    # Dropout: identity (eval mode).
    h = h.astype(jnp.bfloat16)               # bf16 for the K=512 contraction
    out = jnp.dot(h, w2_ref[...], preferred_element_type=jnp.float32)
    out = out + b2_ref[...]                  # b2 is (1, T_pad)
    o_ref[...] = out.astype(o_ref.dtype)


def prepare_classify_country_params(w1, b1, w2, b2):
    """One-time parameter prep (call at load time, NOT per forward call).

    Casts weights to bf16 and pads the class dimension up to a multiple of 128
    so the kernel's output stores are lane-dense.
    w1: [E, H], b1: [H], w2: [H, T], b2: [T]
    """
    E, H = w1.shape
    T = w2.shape[1]
    T_pad = ((T + 127) // 128) * 128
    if T_pad != T:
        w2 = jnp.pad(w2, ((0, 0), (0, T_pad - T)))
        b2 = jnp.pad(b2, (0, T_pad - T))
    return {
        "w1": w1.astype(jnp.bfloat16),
        "b1": b1.reshape(1, H).astype(jnp.float32),
        "w2": w2.astype(jnp.bfloat16),
        "b2": b2.reshape(1, T_pad).astype(jnp.float32),
        "n_classes": T,
    }


def _pick_batch_tile(B, tb=None):
    """Per-generation batch tile.

    v7x (2 TCs/chip): even grid so both TensorCores get work.
    v5e/v6e (1 TC/chip): one big full-extent tile (grid collapses; no per-step
    ~0.35 us overhead, better MXU cadence).
    Falls back to a single full-extent block whenever the (8,128) divisibility
    rule or an uneven last tile would otherwise be violated.
    """
    if tb is None:
        kind = jax.devices()[0].device_kind.lower()
        if ("v7" in kind) and B >= 16:
            tb = ((pl.cdiv(B, 2) + 7) // 8) * 8
        else:
            tb = min(B, 512)
    tb = min(tb, B)
    if tb != B and (tb % 8 != 0 or B % tb != 0):
        tb = B
    return tb


def classify_country(x, params, *, tb=None, out_dtype=jnp.float32,
                     unpad=True, training=False):
    """Forward pass. x: [B, E] f32; params from prepare_classify_country_params.

    Returns [B, T] (or the padded [B, T_pad] slab if unpad=False, letting the
    consumer slice/fuse and avoiding an extra output HBM round trip).
    """
    if training:
        # TODO(synk): training-mode dropout not implemented in the kernel.
        raise NotImplementedError("Classify_country Pallas kernel is eval-mode only.")

    B, E = x.shape
    w1, b1, w2, b2 = params["w1"], params["b1"], params["w2"], params["b2"]
    H = w1.shape[1]
    T_pad = w2.shape[1]
    T = params["n_classes"]
    assert w1.shape[0] == E, f"emb_dim mismatch: x has {E}, w1 has {w1.shape[0]}"

    tb = _pick_batch_tile(B, tb)
    grid = (pl.cdiv(B, tb),)

    out_itemsize = jnp.dtype(out_dtype).itemsize
    bytes_accessed = (
        x.size * x.dtype.itemsize
        + w1.size * 2 + w2.size * 2
        + b1.size * 4 + b2.size * 4
        + B * T_pad * out_itemsize
    )
    cost = pl.CostEstimate(
        flops=2 * B * (E * H + H * T_pad),
        transcendentals=0,
        bytes_accessed=bytes_accessed,
    )

    out = pl.pallas_call(
        _classify_country_kernel,
        out_shape=jax.ShapeDtypeStruct((B, T_pad), out_dtype),
        grid=grid,
        in_specs=[
            pl.BlockSpec((tb, E), lambda i: (i, 0)),       # batch-tiled activations (f32)
            pl.BlockSpec((E, H), lambda i: (0, 0)),        # w1: VMEM-resident across tiles
            pl.BlockSpec((1, H), lambda i: (0, 0)),        # b1
            pl.BlockSpec((H, T_pad), lambda i: (0, 0)),    # w2: VMEM-resident across tiles
            pl.BlockSpec((1, T_pad), lambda i: (0, 0)),    # b2
        ],
        out_specs=pl.BlockSpec((tb, T_pad), lambda i: (i, 0)),
        compiler_params=pltpu.CompilerParams(
            dimension_semantics=("parallel",),             # shard batch tiles across TCs (v7x)
        ),
        cost_estimate=cost,
    )(x, w1, b1, w2, b2)

    if unpad and T_pad != T:
        out = out[:, :T]
    return out


if __name__ == "__main__":
    # Small shapes consistent with the module: emb_dim = 64, hidden = 512
    # (hardcoded in the nn.Sequential), n_classes_country = 32, batch = 16.
    B, E, HID, TAGS = 16, 64, 512, 32

    key = jax.random.PRNGKey(0)
    kx, kw1, kb1, kw2, kb2 = jax.random.split(key, 5)

    x = jax.random.normal(kx, (B, E), dtype=jnp.float32)
    # Deterministic synthetic parameters (not loaded from a checkpoint).
    w1 = jax.random.normal(kw1, (E, HID), dtype=jnp.float32) * 0.02
    b1 = jax.random.normal(kb1, (HID,), dtype=jnp.float32) * 0.01
    w2 = jax.random.normal(kw2, (HID, TAGS), dtype=jnp.float32) * 0.02
    b2 = jax.random.normal(kb2, (TAGS,), dtype=jnp.float32) * 0.01

    # One-time param prep (bf16 cast + class-dim padding) outside the forward path.
    params = prepare_classify_country_params(w1, b1, w2, b2)

    out = classify_country(x, params)
    jax.block_until_ready(out)

    # Pure-JAX f32 reference (eval-mode semantics); tolerance loosened for bf16 path.
    ref = jnp.maximum(x @ w1 + b1, 0.0) @ w2 + b2
    assert out.shape == (B, TAGS), out.shape
    assert jnp.allclose(out, ref, atol=2e-2, rtol=2e-2), (
        float(jnp.max(jnp.abs(out - ref)))
    )

    print("KERNEL_OK")
</pallas_src>

<mosaic_0001>
module attributes {stable_mosaic.version = 11 : i64} {
  func.func @_classify_country_kernel(%arg0: i32, %arg1: memref<16x64xf32, #tpu.memory_space<vmem>>, %arg2: memref<64x512xbf16, #tpu.memory_space<vmem>>, %arg3: memref<1x512xf32, #tpu.memory_space<vmem>>, %arg4: memref<512x128xbf16, #tpu.memory_space<vmem>>, %arg5: memref<1x128xf32, #tpu.memory_space<vmem>>, %arg6: memref<16x128xf32, #tpu.memory_space<vmem>>) attributes {dimension_semantics = [#tpu.dimension_semantics<parallel>], iteration_bounds = array<i64: 1>, scalar_prefetch = 0 : i64, scratch_operands = 0 : i64, tpu.core_type = #tpu.core_type<tc>, window_params = [{transform_indices = @transform_0, window_bounds = array<i64: 16, 64>}, {pipeline_mode = #tpu.pipeline_mode<synchronous>, transform_indices = @transform_1, window_bounds = array<i64: 64, 512>}, {pipeline_mode = #tpu.pipeline_mode<synchronous>, transform_indices = @transform_2, window_bounds = array<i64: 1, 512>}, {pipeline_mode = #tpu.pipeline_mode<synchronous>, transform_indices = @transform_3, window_bounds = array<i64: 512, 128>}, {pipeline_mode = #tpu.pipeline_mode<synchronous>, transform_indices = @transform_4, window_bounds = array<i64: 1, 128>}, {transform_indices = @transform_5, window_bounds = array<i64: 16, 128>}]} {
    %c0 = arith.constant 0 : index
    %c0_0 = arith.constant 0 : index
    %0 = vector.load %arg1[%c0, %c0_0] : memref<16x64xf32, #tpu.memory_space<vmem>>, vector<16x64xf32>
    %1 = arith.truncf %0 : vector<16x64xf32> to vector<16x64xbf16>
    %c0_1 = arith.constant 0 : index
    %c0_2 = arith.constant 0 : index
    %2 = vector.load %arg2[%c0_1, %c0_2] : memref<64x512xbf16, #tpu.memory_space<vmem>>, vector<64x512xbf16>
    %cst = arith.constant dense<0.000000e+00> : vector<16x512xf32>
    %3 = tpu.matmul %1, %2, %cst {dimension_numbers = #tpu.dot_dimension_numbers<[1], [0], [0], [1], [0, 0, 1, 1], [], []>} : vector<16x64xbf16>, vector<64x512xbf16>, vector<16x512xf32> -> vector<16x512xf32>
    %c0_3 = arith.constant 0 : index
    %c0_4 = arith.constant 0 : index
    %4 = vector.load %arg3[%c0_3, %c0_4] : memref<1x512xf32, #tpu.memory_space<vmem>>, vector<1x512xf32>
    %5 = vector.broadcast %4 : vector<1x512xf32> to vector<16x512xf32>
    %6 = arith.addf %3, %5 : vector<16x512xf32>
    %cst_5 = arith.constant 0.000000e+00 : f32
    %7 = vector.broadcast %cst_5 : f32 to vector<16x512xf32>
    %8 = arith.maximumf %6, %7 : vector<16x512xf32>
    %9 = arith.truncf %8 : vector<16x512xf32> to vector<16x512xbf16>
    %c0_6 = arith.constant 0 : index
    %c0_7 = arith.constant 0 : index
    %10 = vector.load %arg4[%c0_6, %c0_7] : memref<512x128xbf16, #tpu.memory_space<vmem>>, vector<512x128xbf16>
    %cst_8 = arith.constant dense<0.000000e+00> : vector<16x128xf32>
    %11 = tpu.matmul %9, %10, %cst_8 {dimension_numbers = #tpu.dot_dimension_numbers<[1], [0], [0], [1], [0, 0, 1, 1], [], []>} : vector<16x512xbf16>, vector<512x128xbf16>, vector<16x128xf32> -> vector<16x128xf32>
    %c0_9 = arith.constant 0 : index
    %c0_10 = arith.constant 0 : index
    %12 = vector.load %arg5[%c0_9, %c0_10] : memref<1x128xf32, #tpu.memory_space<vmem>>, vector<1x128xf32>
    %13 = vector.broadcast %12 : vector<1x128xf32> to vector<16x128xf32>
    %14 = arith.addf %11, %13 : vector<16x128xf32>
    %c0_11 = arith.constant 0 : index
    %c0_12 = arith.constant 0 : index
    %15 = vector.load %arg6[%c0_11, %c0_12] : memref<16x128xf32, #tpu.memory_space<vmem>>, vector<16x128xf32>
    tpu.vector_store %arg6[%c0_11, %c0_12], %14 {strides = array<i32>} : memref<16x128xf32, #tpu.memory_space<vmem>>, vector<16x128xf32>,
    return
  }
  func.func @transform_0(%arg0: i32) -> (i32, i32) {
    %c0_i32 = arith.constant 0 : i32
    %c0_i32_0 = arith.constant 0 : i32
    return %arg0, %c0_i32 : i32, i32
  }
  func.func @transform_1(%arg0: i32) -> (i32, i32) {
    %c0_i32 = arith.constant 0 : i32
    %c0_i32_0 = arith.constant 0 : i32
    %c0_i32_1 = arith.constant 0 : i32
    return %c0_i32, %c0_i32_0 : i32, i32
  }
  func.func @transform_2(%arg0: i32) -> (i32, i32) {
    %c0_i32 = arith.constant 0 : i32
    %c0_i32_0 = arith.constant 0 : i32
    %c0_i32_1 = arith.constant 0 : i32
    return %c0_i32, %c0_i32_0 : i32, i32
  }
  func.func @transform_3(%arg0: i32) -> (i32, i32) {
    %c0_i32 = arith.constant 0 : i32
    %c0_i32_0 = arith.constant 0 : i32
    %c0_i32_1 = arith.constant 0 : i32
    return %c0_i32, %c0_i32_0 : i32, i32
  }
  func.func @transform_4(%arg0: i32) -> (i32, i32) {
    %c0_i32 = arith.constant 0 : i32
    %c0_i32_0 = arith.constant 0 : i32
    %c0_i32_1 = arith.constant 0 : i32
    return %c0_i32, %c0_i32_0 : i32, i32
  }
  func.func @transform_5(%arg0: i32) -> (i32, i32) {
    %c0_i32 = arith.constant 0 : i32
    %c0_i32_0 = arith.constant 0 : i32
    return %arg0, %c0_i32 : i32, i32
  }
}

</mosaic_0001>

<llo_original>
// kernel: tpu_custom_call.1
$region0: #{tpu_custom_call.1}
  #allocation0 [shape = 'u32[]', space=smem, size = 0x4, offset = 0x4, fixed_abs, tag = 'smem constant byte address 0x4 - core index']
  #allocation1 [shape = 'u32[72,128]{1,0:T(1,128)}', space=vmem, size = 0x9000, scoped, tag = 'internal scratch']
  %s0 = inlined_call_operand.hbm [shape: f32[16,64], index: 0, kind: input, shape index: {}]
  %s1 = inlined_call_operand.hbm [shape: bf16[64,512], index: 1, kind: input, shape index: {}]
  %s2 = inlined_call_operand.hbm [shape: f32[1,512], index: 2, kind: input, shape index: {}]
  %s3 = inlined_call_operand.hbm [shape: bf16[512,128], index: 3, kind: input, shape index: {}]
  %s4 = inlined_call_operand.vmem [shape: f32[1,128], index: 4, kind: input, shape index: {}]
  %s5 = inlined_call_operand.hbm [shape: f32[16,128], index: 5, kind: output, shape index: {}]
  %s6 = sld [smem:[#allocation0]]
  $region46: #{tpu_custom_call.1} parent=0
    _
  %s8 = ssub.s32 1, %s6
  %s9 = scalar_select 0, %s8, %s6
  $region1: #{tpu_custom_call.1} parent=0
    #allocation2 [shape = 'u8[8192]{0}', space=vmem, size = 0x2000, scoped, tag = 'input window, operand 0, single buffered']
    #allocation3 [shape = 's32[1]{0}', space=sflag, size = 0x4, scoped, tag = 'scoped memory for tpu_custom_call.1']
    #allocation4 [shape = 's32[1]{0}', space=sflag, size = 0x4, scoped, tag = 'scoped memory for tpu_custom_call.1']
    #allocation5 [shape = 'u8[65536]{0}', space=vmem, size = 0x10000, scoped, tag = 'input window, operand 1, single buffered']
    #allocation6 [shape = 's32[1]{0}', space=sflag, size = 0x4, scoped, tag = 'scoped memory for tpu_custom_call.1']
    #allocation7 [shape = 'u8[2048]{0}', space=vmem, size = 0x800, scoped, tag = 'input window, operand 2, single buffered']
    #allocation8 [shape = 'u8[131072]{0}', space=vmem, size = 0x20000, scoped, tag = 'input window, operand 3, single buffered']
    #allocation9 [shape = 's32[1]{0}', space=sflag, size = 0x4, scoped, tag = 'scoped memory for tpu_custom_call.1']
    #allocation10 [shape = 'u8[8192]{0}', space=vmem, size = 0x2000, scoped, tag = 'output window, operand 0, single buffered']
    %10 = vsyncpa [#allocation3], 0
    %11 = vsyncpa [#allocation6], 0
    %12 = vsyncpa [#allocation9], 0
    %13 = vsyncpa [#allocation4], 0
    // Predicated region
    $region2: #{tpu_custom_call.1} parent=1 // pred_check
      _
    $region3: #{tpu_custom_call.1} parent=1 // pred_check_branch
      %15 = sbr.rel (0) target = $region5
    $region4: #{tpu_custom_call.1} parent=1 // pred_region
      %17 = vsyncadd [#allocation3], 0
      %s18 = sshll.u32 %s0, 4
      %s19 = int_to_ptr.hbm [resolvable:$true] %s18
      %s20 = sshll.u32 [#allocation2], 4
      %s21 = int_to_ptr.vmem [resolvable:$true] %s20
      %26 = dma.hbm_to_vmem [thread:$0]  %s19, 256, %s21, [#allocation3], 128, 128, 8
    $region5: #{tpu_custom_call.1} parent=1 // pred_fallthru
      _
    // Predicated region
    $region6: #{tpu_custom_call.1} parent=1 // pred_check
      _
    $region7: #{tpu_custom_call.1} parent=1 // pred_check_branch
      %28 = sbr.rel (0) target = $region9
    $region8: #{tpu_custom_call.1} parent=1 // pred_region
      %30 = vsyncadd [#allocation6], 0
      %s31 = sshll.u32 %s1, 4
      %s32 = int_to_ptr.hbm [resolvable:$true] %s31
      %s33 = sshll.u32 [#allocation5], 4
      %s34 = int_to_ptr.vmem [resolvable:$true] %s33
      %39 = dma.hbm_to_vmem [thread:$0]  %s32, 2048, %s34, [#allocation6], 256, 256, 16
    $region9: #{tpu_custom_call.1} parent=1 // pred_fallthru
      _
    // Predicated region
    $region10: #{tpu_custom_call.1} parent=1 // pred_check
      _
    $region11: #{tpu_custom_call.1} parent=1 // pred_check_branch
      %41 = sbr.rel (0) target = $region13
    $region12: #{tpu_custom_call.1} parent=1 // pred_region
      %43 = vsyncadd [#allocation6], 0
      %s45 = sshll.u32 %s2, 4
      %s46 = int_to_ptr.hbm [resolvable:$true] %s45
      %s47 = sshll.u32 [#allocation7], 4
      %s48 = int_to_ptr.vmem [resolvable:$true] %s47
      %50 = dma.hbm_to_vmem [thread:$0]  %s46, 64, %s48, [#allocation6]
    $region13: #{tpu_custom_call.1} parent=1 // pred_fallthru
      _
    // Predicated region
    $region14: #{tpu_custom_call.1} parent=1 // pred_check
      _
    $region15: #{tpu_custom_call.1} parent=1 // pred_check_branch
      %52 = sbr.rel (0) target = $region17
    $region16: #{tpu_custom_call.1} parent=1 // pred_region
      %54 = vsyncadd [#allocation9], 0
      %s55 = sshll.u32 %s3, 4
      %s56 = int_to_ptr.hbm [resolvable:$true] %s55
      %s57 = sshll.u32 [#allocation8], 4
      %s58 = int_to_ptr.vmem [resolvable:$true] %s57
      %63 = dma.hbm_to_vmem [thread:$0]  %s56, 4096, %s58, [#allocation9], 64, 64, 4
    $region17: #{tpu_custom_call.1} parent=1 // pred_fallthru
      _
    // Predicated region
    $region18: #{tpu_custom_call.1} parent=1 // pred_check
      _
    $region19: #{tpu_custom_call.1} parent=1 // pred_check_branch
      %65 = sbr.rel (0) target = $region21
    $region20: #{tpu_custom_call.1} parent=1 // pred_region
      _
    $region21: #{tpu_custom_call.1} parent=1 // pred_fallthru
      _
    // Predicated region
    $region22: #{tpu_custom_call.1} parent=1 // pred_check
      _
    $region23: #{tpu_custom_call.1} parent=1 // pred_check_branch
      %67 = sbr.rel (0) target = $region25
    $region24: #{tpu_custom_call.1} parent=1 // pred_region
      %69 = dma.done [#allocation3], 256
    $region25: #{tpu_custom_call.1} parent=1 // pred_fallthru
      _
    // Predicated region
    $region26: #{tpu_custom_call.1} parent=1 // pred_check
      _
    $region27: #{tpu_custom_call.1} parent=1 // pred_check_branch
      %71 = sbr.rel (0) target = $region29
    $region28: #{tpu_custom_call.1} parent=1 // pred_region
      %73 = dma.done [#allocation6], 2048
    $region29: #{tpu_custom_call.1} parent=1 // pred_fallthru
      _
    // Predicated region
    $region30: #{tpu_custom_call.1} parent=1 // pred_check
      _
    $region31: #{tpu_custom_call.1} parent=1 // pred_check_branch
      %75 = sbr.rel (0) target = $region33
    $region32: #{tpu_custom_call.1} parent=1 // pred_region
      %77 = dma.done [#allocation6], 64
    $region33: #{tpu_custom_call.1} parent=1 // pred_fallthru
      _
    // Predicated region
    $region34: #{tpu_custom_call.1} parent=1 // pred_check
      _
    $region35: #{tpu_custom_call.1} parent=1 // pred_check_branch
      %79 = sbr.rel (0) target = $region37
    $region36: #{tpu_custom_call.1} parent=1 // pred_region
      %81 = dma.done [#allocation9], 4096
    $region37: #{tpu_custom_call.1} parent=1 // pred_fallthru
      _
    %v83 = vld [vmem:[#allocation2] sm:$0xff]
    %v84 = vld [vmem:[#allocation2 + $0x8] sm:$0xff]
    %v85 = vpack.c.bf16 %v84, %v83
    %v86 = vld [vmem:[#allocation5] sm:$0xff]
    %v87 = vld [vmem:[#allocation5 + $0x8] sm:$0xff]
    %v88 = vld [vmem:[#allocation5 + $0x10] sm:$0xff]
    %v89 = vld [vmem:[#allocation5 + $0x18] sm:$0xff]
    %v90 = vld [vmem:[#allocation5 + $0x20] sm:$0xff]
    %v91 = vld [vmem:[#allocation5 + $0x28] sm:$0xff]
    %v92 = vld [vmem:[#allocation5 + $0x30] sm:$0xff]
    %v93 = vld [vmem:[#allocation5 + $0x38] sm:$0xff]
    %v94 = vld [vmem:[#allocation5 + $0x40] sm:$0xff]
    %v95 = vld [vmem:[#allocation5 + $0x48] sm:$0xff]
    %v96 = vld [vmem:[#allocation5 + $0x50] sm:$0xff]
    %v97 = vld [vmem:[#allocation5 + $0x58] sm:$0xff]
    %v98 = vld [vmem:[#allocation5 + $0x60] sm:$0xff]
    %v99 = vld [vmem:[#allocation5 + $0x68] sm:$0xff]
    %v100 = vld [vmem:[#allocation5 + $0x70] sm:$0xff]
    %v101 = vld [vmem:[#allocation5 + $0x78] sm:$0xff]
    %v102 = vld [vmem:[#allocation7] sm:$0xf]
    %v104 = vperm.slane %v102, 0
    %v105 = vperm.slane %v102, 1
    %v106 = vperm.slane %v102, 2
    %v107 = vperm.slane %v102, 3
    %v128 = vunpack.c.l.b16 %v86
    %v129 = vunpack.c.h.b16 %v86
    %v130 = vunpack.c.l.b16 %v87
    %v131 = vunpack.c.h.b16 %v87
    %v132 = vunpack.c.l.b16 %v88
    %v133 = vunpack.c.h.b16 %v88
    %v134 = vunpack.c.l.b16 %v89
    %v135 = vunpack.c.h.b16 %v89
    %v136 = vunpack.c.l.b16 %v90
    %v137 = vunpack.c.h.b16 %v90
    %v138 = vunpack.c.l.b16 %v91
    %v139 = vunpack.c.h.b16 %v91
    %v140 = vunpack.c.l.b16 %v92
    %v141 = vunpack.c.h.b16 %v92
    %v142 = vunpack.c.l.b16 %v93
    %v143 = vunpack.c.h.b16 %v93
    %v144 = vunpack.c.l.b16 %v94
    %v145 = vunpack.c.h.b16 %v94
    %v146 = vunpack.c.l.b16 %v95
    %v147 = vunpack.c.h.b16 %v95
    %v148 = vunpack.c.l.b16 %v96
    %v149 = vunpack.c.h.b16 %v96
    %v150 = vunpack.c.l.b16 %v97
    %v151 = vunpack.c.h.b16 %v97
    %v152 = vunpack.c.l.b16 %v98
    %v153 = vunpack.c.h.b16 %v98
    %v154 = vunpack.c.l.b16 %v99
    %v155 = vunpack.c.h.b16 %v99
    %v156 = vunpack.c.l.b16 %v100
    %v157 = vunpack.c.h.b16 %v100
    %v158 = vunpack.c.l.b16 %v101
    %v159 = vunpack.c.h.b16 %v101
    %v160 = vpack.c.b16 %v132, %v128
    %v161 = vpack.c.b16 %v133, %v129
    %v162 = vpack.c.b16 %v134, %v130
    %v163 = vpack.c.b16 %v135, %v131
    %v164 = vpack.c.b16 %v140, %v136
    %v165 = vpack.c.b16 %v141, %v137
    %v166 = vpack.c.b16 %v142, %v138
    %v167 = vpack.c.b16 %v143, %v139
    %v168 = vpack.c.b16 %v148, %v144
    %v169 = vpack.c.b16 %v149, %v145
    %v170 = vpack.c.b16 %v150, %v146
    %v171 = vpack.c.b16 %v151, %v147
    %v172 = vpack.c.b16 %v156, %v152
    %v173 = vpack.c.b16 %v157, %v153
    %v174 = vpack.c.b16 %v158, %v154
    %v175 = vpack.c.b16 %v159, %v155
    %vm192 = vcmask 523264
    %v194 = vsel %vm192, %v85, 0
    %196 = vmatpush.bf16.msra.mxu0 0
    %197 = vmatpush.bf16.msra.mxu0 0
    %198 = vmatpush.bf16.msra.mxu0 0
    %199 = vmatpush.bf16.msra.mxu0 0
    %200 = vmatpush.bf16.msra.mxu0 %v172
    %201 = vmatpush.bf16.msra.mxu0 %v168
    %202 = vmatpush.bf16.msra.mxu0 %v164
    %203 = vmatpush.bf16.msra.mxu0 %v160
    %204 = vmatmul.bf16.gmra.mxu0 %v194
    %v205 = vpop.f32.mrf.mxu0
    %v206 = vadd.f32 %v104, %v205
    %v207 = vpop.f32.mrf.mxu0
    %v208 = vadd.f32 %v104, %v207
    %209 = vdwg.mxu0
    %210 = vmatpush.bf16.msra.mxu0 0
    %211 = vmatpush.bf16.msra.mxu0 0
    %212 = vmatpush.bf16.msra.mxu0 0
    %213 = vmatpush.bf16.msra.mxu0 0
    %214 = vmatpush.bf16.msra.mxu0 %v173
    %215 = vmatpush.bf16.msra.mxu0 %v169
    %216 = vmatpush.bf16.msra.mxu0 %v165
    %217 = vmatpush.bf16.msra.mxu0 %v161
    %218 = vmatmul.bf16.gmra.mxu0 %v194
    %v219 = vpop.f32.mrf.mxu0
    %v220 = vadd.f32 %v105, %v219
    %v221 = vpop.f32.mrf.mxu0
    %v222 = vadd.f32 %v105, %v221
    %223 = vdwg.mxu0
    %224 = vmatpush.bf16.msra.mxu0 0
    %225 = vmatpush.bf16.msra.mxu0 0
    %226 = vmatpush.bf16.msra.mxu0 0
    %227 = vmatpush.bf16.msra.mxu0 0
    %228 = vmatpush.bf16.msra.mxu0 %v174
    %229 = vmatpush.bf16.msra.mxu0 %v170
    %230 = vmatpush.bf16.msra.mxu0 %v166
    %231 = vmatpush.bf16.msra.mxu0 %v162
    %232 = vmatmul.bf16.gmra.mxu0 %v194
    %v233 = vpop.f32.mrf.mxu0
    %v234 = vadd.f32 %v106, %v233
    %v235 = vpop.f32.mrf.mxu0
    %v236 = vadd.f32 %v106, %v235
    %237 = vdwg.mxu0
    %238 = vmatpush.bf16.msra.mxu0 0
    %239 = vmatpush.bf16.msra.mxu0 0
    %240 = vmatpush.bf16.msra.mxu0 0
    %241 = vmatpush.bf16.msra.mxu0 0
    %242 = vmatpush.bf16.msra.mxu0 %v175
    %243 = vmatpush.bf16.msra.mxu0 %v171
    %244 = vmatpush.bf16.msra.mxu0 %v167
    %245 = vmatpush.bf16.msra.mxu0 %v163
    %246 = vmatmul.bf16.gmra.mxu0 %v194
    %v247 = vpop.f32.mrf.mxu0
    %v248 = vadd.f32 %v107, %v247
    %v249 = vpop.f32.mrf.mxu0
    %v250 = vadd.f32 %v107, %v249
    %251 = vdwg.mxu0
    %v252 = vmax.f32 %v206, 0.0
    %v253 = vmax.f32 %v220, 0.0
    %v254 = vmax.f32 %v234, 0.0
    %v255 = vmax.f32 %v248, 0.0
    %v256 = vmax.f32 %v208, 0.0
    %v257 = vmax.f32 %v222, 0.0
    %v258 = vmax.f32 %v236, 0.0
    %v259 = vmax.f32 %v250, 0.0
    %v260 = vpack.c.bf16 %v256, %v252
    %v261 = vpack.c.bf16 %v257, %v253
    %v262 = vpack.c.bf16 %v258, %v254
    %v263 = vpack.c.bf16 %v259, %v255
    %v264 = vld [vmem:[#allocation8] sm:$0xf]
    %v265 = vld [vmem:[#allocation8 + $0x4] sm:$0xf]
    %v266 = vld [vmem:[#allocation8 + $0x8] sm:$0xf]
    %v267 = vld [vmem:[#allocation8 + $0xc] sm:$0xf]
    %v268 = vld [vmem:[#allocation8 + $0x10] sm:$0xf]
    %v269 = vld [vmem:[#allocation8 + $0x14] sm:$0xf]
    %v270 = vld [vmem:[#allocation8 + $0x18] sm:$0xf]
    %v271 = vld [vmem:[#allocation8 + $0x1c] sm:$0xf]
    %v272 = vld [vmem:[#allocation8 + $0x20] sm:$0xf]
    %v273 = vld [vmem:[#allocation8 + $0x24] sm:$0xf]
    %v274 = vld [vmem:[#allocation8 + $0x28] sm:$0xf]
    %v275 = vld [vmem:[#allocation8 + $0x2c] sm:$0xf]
    %v276 = vld [vmem:[#allocation8 + $0x30] sm:$0xf]
    %v277 = vld [vmem:[#allocation8 + $0x34] sm:$0xf]
    %v278 = vld [vmem:[#allocation8 + $0x38] sm:$0xf]
    %v279 = vld [vmem:[#allocation8 + $0x3c] sm:$0xf]
    %v280 = vld [vmem:[#allocation8 + $0x40] sm:$0xf]
    %v281 = vld [vmem:[#allocation8 + $0x44] sm:$0xf]
    %v282 = vld [vmem:[#allocation8 + $0x48] sm:$0xf]
    %v283 = vld [vmem:[#allocation8 + $0x4c] sm:$0xf]
    %v284 = vld [vmem:[#allocation8 + $0x50] sm:$0xf]
    %v285 = vld [vmem:[#allocation8 + $0x54] sm:$0xf]
    %v286 = vld [vmem:[#allocation8 + $0x58] sm:$0xf]
    %v287 = vld [vmem:[#allocation8 + $0x5c] sm:$0xf]
    %v288 = vld [vmem:[#allocation8 + $0x60] sm:$0xf]
    %v289 = vld [vmem:[#allocation8 + $0x64] sm:$0xf]
    %v290 = vld [vmem:[#allocation8 + $0x68] sm:$0xf]
    %v291 = vld [vmem:[#allocation8 + $0x6c] sm:$0xf]
    %v292 = vld [vmem:[#allocation8 + $0x70] sm:$0xf]
    %v293 = vld [vmem:[#allocation8 + $0x74] sm:$0xf]
    %v294 = vld [vmem:[#allocation8 + $0x78] sm:$0xf]
    %v295 = vld [vmem:[#allocation8 + $0x7c] sm:$0xf]
    %v296 = vld [vmem:[#allocation8 + $0x80] sm:$0xf]
    %v297 = vld [vmem:[#allocation8 + $0x84] sm:$0xf]
    %v298 = vld [vmem:[#allocation8 + $0x88] sm:$0xf]
    %v299 = vld [vmem:[#allocation8 + $0x8c] sm:$0xf]
    %v300 = vld [vmem:[#allocation8 + $0x90] sm:$0xf]
    %v301 = vld [vmem:[#allocation8 + $0x94] sm:$0xf]
    %v302 = vld [vmem:[#allocation8 + $0x98] sm:$0xf]
    %v303 = vld [vmem:[#allocation8 + $0x9c] sm:$0xf]
    %v304 = vld [vmem:[#allocation8 + $0xa0] sm:$0xf]
    %v305 = vld [vmem:[#allocation8 + $0xa4] sm:$0xf]
    %v306 = vld [vmem:[#allocation8 + $0xa8] sm:$0xf]
    %v307 = vld [vmem:[#allocation8 + $0xac] sm:$0xf]
    %v308 = vld [vmem:[#allocation8 + $0xb0] sm:$0xf]
    %v309 = vld [vmem:[#allocation8 + $0xb4] sm:$0xf]
    %v310 = vld [vmem:[#allocation8 + $0xb8] sm:$0xf]
    %v311 = vld [vmem:[#allocation8 + $0xbc] sm:$0xf]
    %v312 = vld [vmem:[#allocation8 + $0xc0] sm:$0xf]
    %v313 = vld [vmem:[#allocation8 + $0xc4] sm:$0xf]
    %v314 = vld [vmem:[#allocation8 + $0xc8] sm:$0xf]
    %v315 = vld [vmem:[#allocation8 + $0xcc] sm:$0xf]
    %v316 = vld [vmem:[#allocation8 + $0xd0] sm:$0xf]
    %v317 = vld [vmem:[#allocation8 + $0xd4] sm:$0xf]
    %v318 = vld [vmem:[#allocation8 + $0xd8] sm:$0xf]
    %v319 = vld [vmem:[#allocation8 + $0xdc] sm:$0xf]
    %v320 = vld [vmem:[#allocation8 + $0xe0] sm:$0xf]
    %v321 = vld [vmem:[#allocation8 + $0xe4] sm:$0xf]
    %v322 = vld [vmem:[#allocation8 + $0xe8] sm:$0xf]
    %v323 = vld [vmem:[#allocation8 + $0xec] sm:$0xf]
    %v324 = vld [vmem:[#allocation8 + $0xf0] sm:$0xf]
    %v325 = vld [vmem:[#allocation8 + $0xf4] sm:$0xf]
    %v326 = vld [vmem:[#allocation8 + $0xf8] sm:$0xf]
    %v327 = vld [vmem:[#allocation8 + $0xfc] sm:$0xf]
    %v328 = vld [vmem:[%s4] sm:$0x1]
    %v330 = vperm.slane %v328, 0
    %v396 = vunpack.c.l.b16 %v264
    %v397 = vunpack.c.l.b16 %v265
    %v398 = vunpack.c.l.b16 %v266
    %v399 = vunpack.c.l.b16 %v267
    %v400 = vunpack.c.l.b16 %v268
    %v401 = vunpack.c.l.b16 %v269
    %v402 = vunpack.c.l.b16 %v270
    %v403 = vunpack.c.l.b16 %v271
    %v404 = vunpack.c.l.b16 %v272
    %v405 = vunpack.c.l.b16 %v273
    %v406 = vunpack.c.l.b16 %v274
    %v407 = vunpack.c.l.b16 %v275
    %v408 = vunpack.c.l.b16 %v276
    %v409 = vunpack.c.l.b16 %v277
    %v410 = vunpack.c.l.b16 %v278
    %v411 = vunpack.c.l.b16 %v279
    %v412 = vunpack.c.l.b16 %v280
    %v413 = vunpack.c.l.b16 %v281
    %v414 = vunpack.c.l.b16 %v282
    %v415 = vunpack.c.l.b16 %v283
    %v416 = vunpack.c.l.b16 %v284
    %v417 = vunpack.c.l.b16 %v285
    %v418 = vunpack.c.l.b16 %v286
    %v419 = vunpack.c.l.b16 %v287
    %v420 = vunpack.c.l.b16 %v288
    %v421 = vunpack.c.l.b16 %v289
    %v422 = vunpack.c.l.b16 %v290
    %v423 = vunpack.c.l.b16 %v291
    %v424 = vunpack.c.l.b16 %v292
    %v425 = vunpack.c.l.b16 %v293
    %v426 = vunpack.c.l.b16 %v294
    %v427 = vunpack.c.l.b16 %v295
    %v428 = vunpack.c.l.b16 %v296
    %v429 = vunpack.c.l.b16 %v297
    %v430 = vunpack.c.l.b16 %v298
    %v431 = vunpack.c.l.b16 %v299
    %v432 = vunpack.c.l.b16 %v300
    %v433 = vunpack.c.l.b16 %v301
    %v434 = vunpack.c.l.b16 %v302
    %v435 = vunpack.c.l.b16 %v303
    %v436 = vunpack.c.l.b16 %v304
    %v437 = vunpack.c.l.b16 %v305
    %v438 = vunpack.c.l.b16 %v306
    %v439 = vunpack.c.l.b16 %v307
    %v440 = vunpack.c.l.b16 %v308
    %v441 = vunpack.c.l.b16 %v309
    %v442 = vunpack.c.l.b16 %v310
    %v443 = vunpack.c.l.b16 %v311
    %v444 = vunpack.c.l.b16 %v312
    %v445 = vunpack.c.l.b16 %v313
    %v446 = vunpack.c.l.b16 %v314
    %v447 = vunpack.c.l.b16 %v315
    %v448 = vunpack.c.l.b16 %v316
    %v449 = vunpack.c.l.b16 %v317
    %v450 = vunpack.c.l.b16 %v318
    %v451 = vunpack.c.l.b16 %v319
    %v452 = vunpack.c.l.b16 %v320
    %v453 = vunpack.c.l.b16 %v321
    %v454 = vunpack.c.l.b16 %v322
    %v455 = vunpack.c.l.b16 %v323
    %v456 = vunpack.c.l.b16 %v324
    %v457 = vunpack.c.l.b16 %v325
    %v458 = vunpack.c.l.b16 %v326
    %v459 = vunpack.c.l.b16 %v327
    %v460 = vpack.c.b16 %v397, %v396
    %v461 = vpack.c.b16 %v399, %v398
    %v462 = vpack.c.b16 %v401, %v400
    %v463 = vpack.c.b16 %v403, %v402
    %v464 = vpack.c.b16 %v405, %v404
    %v465 = vpack.c.b16 %v407, %v406
    %v466 = vpack.c.b16 %v409, %v408
    %v467 = vpack.c.b16 %v411, %v410
    %v468 = vpack.c.b16 %v413, %v412
    %v469 = vpack.c.b16 %v415, %v414
    %v470 = vpack.c.b16 %v417, %v416
    %v471 = vpack.c.b16 %v419, %v418
    %v472 = vpack.c.b16 %v421, %v420
    %v473 = vpack.c.b16 %v423, %v422
    %v474 = vpack.c.b16 %v425, %v424
    %v475 = vpack.c.b16 %v427, %v426
    %v476 = vpack.c.b16 %v429, %v428
    %v477 = vpack.c.b16 %v431, %v430
    %v478 = vpack.c.b16 %v433, %v432
    %v479 = vpack.c.b16 %v435, %v434
    %v480 = vpack.c.b16 %v437, %v436
    %v481 = vpack.c.b16 %v439, %v438
    %v482 = vpack.c.b16 %v441, %v440
    %v483 = vpack.c.b16 %v443, %v442
    %v484 = vpack.c.b16 %v445, %v444
    %v485 = vpack.c.b16 %v447, %v446
    %v486 = vpack.c.b16 %v449, %v448
    %v487 = vpack.c.b16 %v451, %v450
    %v488 = vpack.c.b16 %v453, %v452
    %v489 = vpack.c.b16 %v455, %v454
    %v490 = vpack.c.b16 %v457, %v456
    %v491 = vpack.c.b16 %v459, %v458
    %524 = vmatpush.bf16.msra.mxu0 %v467
    %525 = vmatpush.bf16.msra.mxu0 %v466
    %526 = vmatpush.bf16.msra.mxu0 %v465
    %527 = vmatpush.bf16.msra.mxu0 %v464
    %528 = vmatpush.bf16.msra.mxu0 %v463
    %529 = vmatpush.bf16.msra.mxu0 %v462
    %530 = vmatpush.bf16.msra.mxu0 %v461
    %531 = vmatpush.bf16.msra.mxu0 %v460
    %532 = vmatmul.bf16.gmra.mxu0 %v260
    %v533 = vpop.f32.mrf.mxu0
    %v534 = vadd.f32 %v330, %v533
    %v535 = vpop.f32.mrf.mxu0
    %v536 = vadd.f32 %v330, %v535
    %537 = vdwg.mxu0
    %538 = vmatpush.bf16.msra.mxu0 %v475
    %539 = vmatpush.bf16.msra.mxu0 %v474
    %540 = vmatpush.bf16.msra.mxu0 %v473
    %541 = vmatpush.bf16.msra.mxu0 %v472
    %542 = vmatpush.bf16.msra.mxu0 %v471
    %543 = vmatpush.bf16.msra.mxu0 %v470
    %544 = vmatpush.bf16.msra.mxu0 %v469
    %545 = vmatpush.bf16.msra.mxu0 %v468
    %546 = vmatmul.bf16.gmra.mxu0 %v261
    %v547 = vpop.f32.mrf.mxu0
    %v548 = vadd.f32 %v534, %v547
    %v549 = vpop.f32.mrf.mxu0
    %v550 = vadd.f32 %v536, %v549
    %551 = vdwg.mxu0
    %552 = vmatpush.bf16.msra.mxu0 %v483
    %553 = vmatpush.bf16.msra.mxu0 %v482
    %554 = vmatpush.bf16.msra.mxu0 %v481
    %555 = vmatpush.bf16.msra.mxu0 %v480
    %556 = vmatpush.bf16.msra.mxu0 %v479
    %557 = vmatpush.bf16.msra.mxu0 %v478
    %558 = vmatpush.bf16.msra.mxu0 %v477
    %559 = vmatpush.bf16.msra.mxu0 %v476
    %560 = vmatmul.bf16.gmra.mxu0 %v262
    %v561 = vpop.f32.mrf.mxu0
    %v562 = vadd.f32 %v548, %v561
    %v563 = vpop.f32.mrf.mxu0
    %v564 = vadd.f32 %v550, %v563
    %565 = vdwg.mxu0
    %566 = vmatpush.bf16.msra.mxu0 %v491
    %567 = vmatpush.bf16.msra.mxu0 %v490
    %568 = vmatpush.bf16.msra.mxu0 %v489
    %569 = vmatpush.bf16.msra.mxu0 %v488
    %570 = vmatpush.bf16.msra.mxu0 %v487
    %571 = vmatpush.bf16.msra.mxu0 %v486
    %572 = vmatpush.bf16.msra.mxu0 %v485
    %573 = vmatpush.bf16.msra.mxu0 %v484
    %574 = vmatmul.bf16.gmra.mxu0 %v263
    %v575 = vpop.f32.mrf.mxu0
    %v576 = vadd.f32 %v562, %v575
    %v577 = vpop.f32.mrf.mxu0
    %v578 = vadd.f32 %v564, %v577
    %579 = vdwg.mxu0
    %580 = vst [vmem:[#allocation10] sm:$0xff] %v576
    %581 = vst [vmem:[#allocation10 + $0x8] sm:$0xff] %v578
    // Predicated region
    $region38: #{tpu_custom_call.1} parent=1 // pred_check
      _
    $region39: #{tpu_custom_call.1} parent=1 // pred_check_branch
      %583 = sbr.rel (0) target = $region41
    $region40: #{tpu_custom_call.1} parent=1 // pred_region
      %585 = vsyncadd [#allocation4], 0
      %s586 = sshll.u32 [#allocation10], 4
      %s587 = int_to_ptr.vmem [resolvable:$true] %s586
      %s588 = sshll.u32 %s5, 4
      %s589 = int_to_ptr.hbm [resolvable:$true] %s588
      %594 = dma.vmem_to_hbm [thread:$0]  %s587, 256, %s589, [#allocation4], 128, 128, 8
    $region41: #{tpu_custom_call.1} parent=1 // pred_fallthru
      _
    // Predicated region
    $region42: #{tpu_custom_call.1} parent=1 // pred_check
      _
    $region43: #{tpu_custom_call.1} parent=1 // pred_check_branch
      %596 = sbr.rel (0) target = $region45
    $region44: #{tpu_custom_call.1} parent=1 // pred_region
      %598 = dma.done [#allocation4], 256
    $region45: #{tpu_custom_call.1} parent=1 // pred_fallthru
      _
    %599 = vsyncpa [#allocation3], 1
    %600 = vsyncpa [#allocation6], 1
    %601 = vsyncpa [#allocation9], 1
    %602 = vsyncpa [#allocation4], 1

</llo_original>
